<compile_context>
chip_gen: v6e
topology: v6e:2x2x1
jax: 0.10.0
libtpu: 0.0.40
codegen_flags: <defaults>
</compile_context>

<pallas_src>
import jax
import jax.numpy as jnp
from jax import lax
from jax.experimental import pallas as pl
from jax.experimental.pallas import tpu as pltpu


_X_BLOCK_BUDGET_BYTES = 4 * 1024 * 1024    # per x tile (double-buffered in+out)
_VMEM_LIMIT_BYTES = 40 * 1024 * 1024       # safe on v5e/v6e (128 MiB) and v7x (64 MiB)


def _pick_tiles(R, L, itemsize):
    """Row/lane tile sizes for the (R=N*C, L=H*W) view of x.

    Accounts for physical VMEM padding: a block occupies
    ceil(rows/pack)*pack x ceil(lanes/128)*128 elements, with pack = 8 (f32),
    16 (bf16), 32 (int8/fp8) sublanes.
    """
    pack = max(8, 32 // itemsize)
    pad = lambda n, g: -(-n // g) * g
    budget = _X_BLOCK_BUDGET_BYTES
    padded_L = pad(L, 128)

    # Whole array fits in one block.
    if pad(R, pack) * padded_L * itemsize <= budget:
        return R, L

    # Full-L row slabs: lane-dense, no lane masking, rows axis fully parallel.
    rows_fit = budget // (padded_L * itemsize)
    if rows_fit >= pack:
        return min(R, (rows_fit // pack) * pack), L

    # Huge L: minimum sublane-dense row tile, tile lanes in multiples of 128.
    tr = min(R, pack)
    tl = max(128, (budget // (pack * itemsize)) // 128 * 128)
    return tr, tl


def _stats_kernel(tl, L):
    """Accumulate per-row sum(x) and sum(x*x) in f32 (single read of x)."""
    needs_mask = (tl < L) and (L % tl != 0)
    rem = L % tl  # static

    def kernel(x_ref, sum_ref, sq_ref):
        l = pl.program_id(1)
        nl = pl.num_programs(1)

        @pl.when(l == 0)
        def _():
            sum_ref[...] = jnp.zeros_like(sum_ref)
            sq_ref[...] = jnp.zeros_like(sq_ref)

        def accumulate(x):
            sum_ref[...] += jnp.sum(x, axis=1, keepdims=True)   # (tr, 1)
            sq_ref[...] += jnp.sum(x * x, axis=1, keepdims=True)

        if needs_mask:
            # Mask only the single ragged last lane tile; every other grid
            # step runs mask-free so the pass stays HBM-bound.
            @pl.when(l < nl - 1)
            def _():
                accumulate(x_ref[...].astype(jnp.float32))

            @pl.when(l == nl - 1)
            def _():
                lane = lax.broadcasted_iota(jnp.int32, (1, tl), 1)
                x = jnp.where(lane < rem, x_ref[...].astype(jnp.float32), 0.0)
                accumulate(x)
        else:
            accumulate(x_ref[...].astype(jnp.float32))

    return kernel


def _normalize_kernel(x_ref, scale_ref, shift_ref, o_ref):
    # One multiply-add per element; (tr, 1) scale/shift broadcast over lanes.
    # Compute dtype follows scale_ref (bf16 for bf16 inputs, else f32).
    cdt = scale_ref.dtype
    o_ref[...] = (x_ref[...].astype(cdt) * scale_ref[...]
                  + shift_ref[...]).astype(o_ref.dtype)


def new_batch_norm_2d(x_nchw, gamma, beta, eps=1e-5, donate_input=False):
    """x_nchw: (N, C, H, W); gamma, beta: (C,).  Returns (N, C, H, W)."""
    N, C, H, W = x_nchw.shape
    R, L = N * C, H * W
    x2 = x_nchw.reshape(R, L)                      # free reshape, no transpose

    itemsize = jnp.dtype(x_nchw.dtype).itemsize
    tr, tl = _pick_tiles(R, L, itemsize)
    nr, nl = pl.cdiv(R, tr), pl.cdiv(L, tl)

    # ---- Pass 1: streamed per-row statistics (sum, sum of squares). ----
    sums, sqs = pl.pallas_call(
        _stats_kernel(tl, L),
        out_shape=(
            jax.ShapeDtypeStruct((R, 1), jnp.float32),
            jax.ShapeDtypeStruct((R, 1), jnp.float32),
        ),
        grid=(nr, nl),
        in_specs=[pl.BlockSpec((tr, tl), lambda r, l: (r, l))],
        out_specs=(
            pl.BlockSpec((tr, 1), lambda r, l: (r, 0)),
            pl.BlockSpec((tr, 1), lambda r, l: (r, 0)),
        ),
        compiler_params=pltpu.CompilerParams(
            dimension_semantics=("parallel", "arbitrary"),
            vmem_limit_bytes=_VMEM_LIMIT_BYTES,
        ),
    )(x2)

    # ---- O(N*C) glue: channel mean/var folded into per-row scale/shift. ----
    # Note: E[x^2] - mean^2 in f32 can lose precision when |mean| >> std; the
    # per-row partials summed as a tree over N already help vs. one global
    # resident accumulator.
    count = jnp.float32(N * L)
    ch_sum = sums.reshape(N, C).sum(axis=0)                 # (C,)
    ch_sq = sqs.reshape(N, C).sum(axis=0)                   # (C,)
    mean = ch_sum / count
    var = jnp.maximum(ch_sq / count - mean * mean, 0.0)     # biased variance
    inv_std = lax.rsqrt(var + jnp.float32(eps))
    scale_c = gamma.astype(jnp.float32) * inv_std           # (C,)
    shift_c = beta.astype(jnp.float32) - mean * scale_c     # (C,)

    # bf16 inputs: compute the FMA in bf16 (native on v6e/v7x; v5e widens).
    compute_dtype = jnp.bfloat16 if x_nchw.dtype == jnp.bfloat16 else jnp.float32
    scale_r = jnp.broadcast_to(scale_c[None, :], (N, C)).reshape(R, 1).astype(compute_dtype)
    shift_r = jnp.broadcast_to(shift_c[None, :], (N, C)).reshape(R, 1).astype(compute_dtype)

    # ---- Pass 2: streamed elementwise normalize (one FMA per element). ----
    y2 = pl.pallas_call(
        _normalize_kernel,
        out_shape=jax.ShapeDtypeStruct((R, L), x_nchw.dtype),
        grid=(nr, nl),
        in_specs=[
            pl.BlockSpec((tr, tl), lambda r, l: (r, l)),
            pl.BlockSpec((tr, 1), lambda r, l: (r, 0)),
            pl.BlockSpec((tr, 1), lambda r, l: (r, 0)),
        ],
        out_specs=pl.BlockSpec((tr, tl), lambda r, l: (r, l)),
        # Opt-in in-place write of y over x (only safe if the caller donates x).
        input_output_aliases=({0: 0} if donate_input else {}),
        compiler_params=pltpu.CompilerParams(
            dimension_semantics=("parallel", "parallel"),
            vmem_limit_bytes=_VMEM_LIMIT_BYTES,
        ),
    )(x2, scale_r, shift_r)

    return y2.reshape(N, C, H, W)


def _reference(x, gamma, beta, eps=1e-5):
    mean = jnp.mean(x, axis=(0, 2, 3), keepdims=True)
    var = jnp.mean((x - mean) ** 2, axis=(0, 2, 3), keepdims=True)
    return (x - mean) / jnp.sqrt(var + eps) * gamma.reshape(1, -1, 1, 1) \
        + beta.reshape(1, -1, 1, 1)


if __name__ == "__main__":
    N, C, H, W = 2, 4, 16, 16
    eps = 1e-5  # nn.BatchNorm2d default

    key = jax.random.PRNGKey(0)
    kx, kg, kb = jax.random.split(key, 3)
    x = jax.random.normal(kx, (N, C, H, W), dtype=jnp.float32)
    # Deterministic "frozen" affine parameters (synthetic, not a checkpoint).
    gamma = 1.0 + 0.1 * jax.random.normal(kg, (C,), dtype=jnp.float32)
    beta = 0.1 * jax.random.normal(kb, (C,), dtype=jnp.float32)

    fn = jax.jit(new_batch_norm_2d, static_argnames=("eps", "donate_input"))
    y = jax.block_until_ready(fn(x, gamma, beta, eps=eps))

    y_ref = _reference(x, gamma, beta, eps=eps)
    assert y.shape == (N, C, H, W)
    assert jnp.allclose(y, y_ref, atol=1e-5, rtol=1e-5), "mismatch vs reference"

    print("KERNEL_OK")
</pallas_src>

<mosaic_0001>
module attributes {stable_mosaic.version = 11 : i64} {
  func.func @kernel(%arg0: i32, %arg1: i32, %arg2: memref<8x256xf32, #tpu.memory_space<vmem>>, %arg3: memref<8x1xf32, #tpu.memory_space<vmem>>, %arg4: memref<8x1xf32, #tpu.memory_space<vmem>>) attributes {dimension_semantics = [#tpu.dimension_semantics<parallel>, #tpu.dimension_semantics<arbitrary>], iteration_bounds = array<i64: 1, 1>, scalar_prefetch = 0 : i64, scratch_operands = 0 : i64, tpu.core_type = #tpu.core_type<tc>, window_params = [{transform_indices = @transform_0, window_bounds = array<i64: 8, 256>}, {transform_indices = @transform_1, window_bounds = array<i64: 8, 1>}, {transform_indices = @transform_2, window_bounds = array<i64: 8, 1>}]} {
    %c0_i32 = arith.constant 0 : i32
    %0 = arith.cmpi eq, %arg1, %c0_i32 : i32
    %1 = arith.extui %0 : i1 to i32
    %c0_i32_0 = arith.constant 0 : i32
    %2 = arith.cmpi ne, %1, %c0_i32_0 : i32
    scf.if %2 {
      %cst_11 = arith.constant 0.000000e+00 : f32
      %15 = vector.broadcast %cst_11 : f32 to vector<8x1xf32>
      %c0_12 = arith.constant 0 : index
      %c0_13 = arith.constant 0 : index
      %16 = vector.load %arg3[%c0_12, %c0_13] : memref<8x1xf32, #tpu.memory_space<vmem>>, vector<8x1xf32>
      tpu.vector_store %arg3[%c0_12, %c0_13], %15 {strides = array<i32>} : memref<8x1xf32, #tpu.memory_space<vmem>>, vector<8x1xf32>,
      %cst_14 = arith.constant 0.000000e+00 : f32
      %17 = vector.broadcast %cst_14 : f32 to vector<8x1xf32>
      %c0_15 = arith.constant 0 : index
      %c0_16 = arith.constant 0 : index
      %18 = vector.load %arg4[%c0_15, %c0_16] : memref<8x1xf32, #tpu.memory_space<vmem>>, vector<8x1xf32>
      tpu.vector_store %arg4[%c0_15, %c0_16], %17 {strides = array<i32>} : memref<8x1xf32, #tpu.memory_space<vmem>>, vector<8x1xf32>,
    } else {
    }
    %c0 = arith.constant 0 : index
    %c0_1 = arith.constant 0 : index
    %3 = vector.load %arg2[%c0, %c0_1] : memref<8x256xf32, #tpu.memory_space<vmem>>, vector<8x256xf32>
    %c0_2 = arith.constant 0 : index
    %c0_3 = arith.constant 0 : index
    %4 = vector.load %arg3[%c0_2, %c0_3] : memref<8x1xf32, #tpu.memory_space<vmem>>, vector<8x1xf32>
    %cst = arith.constant dense<0.000000e+00> : vector<8xf32>
    %5 = vector.multi_reduction <add>, %3, %cst [1] : vector<8x256xf32> to vector<8xf32>
    %6 = vector.shape_cast %5 : vector<8xf32> to vector<8x1xf32>
    %7 = arith.addf %4, %6 : vector<8x1xf32>
    %c0_4 = arith.constant 0 : index
    %c0_5 = arith.constant 0 : index
    %8 = vector.load %arg3[%c0_4, %c0_5] : memref<8x1xf32, #tpu.memory_space<vmem>>, vector<8x1xf32>
    tpu.vector_store %arg3[%c0_4, %c0_5], %7 {strides = array<i32>} : memref<8x1xf32, #tpu.memory_space<vmem>>, vector<8x1xf32>,
    %c0_6 = arith.constant 0 : index
    %c0_7 = arith.constant 0 : index
    %9 = vector.load %arg4[%c0_6, %c0_7] : memref<8x1xf32, #tpu.memory_space<vmem>>, vector<8x1xf32>
    %10 = arith.mulf %3, %3 : vector<8x256xf32>
    %cst_8 = arith.constant dense<0.000000e+00> : vector<8xf32>
    %11 = vector.multi_reduction <add>, %10, %cst_8 [1] : vector<8x256xf32> to vector<8xf32>
    %12 = vector.shape_cast %11 : vector<8xf32> to vector<8x1xf32>
    %13 = arith.addf %9, %12 : vector<8x1xf32>
    %c0_9 = arith.constant 0 : index
    %c0_10 = arith.constant 0 : index
    %14 = vector.load %arg4[%c0_9, %c0_10] : memref<8x1xf32, #tpu.memory_space<vmem>>, vector<8x1xf32>
    tpu.vector_store %arg4[%c0_9, %c0_10], %13 {strides = array<i32>} : memref<8x1xf32, #tpu.memory_space<vmem>>, vector<8x1xf32>,
    return
  }
  func.func @transform_0(%arg0: i32, %arg1: i32) -> (i32, i32) {
    %c0_i32 = arith.constant 0 : i32
    return %arg0, %arg1 : i32, i32
  }
  func.func @transform_1(%arg0: i32, %arg1: i32) -> (i32, i32) {
    %c0_i32 = arith.constant 0 : i32
    %c0_i32_0 = arith.constant 0 : i32
    return %arg0, %c0_i32 : i32, i32
  }
  func.func @transform_2(%arg0: i32, %arg1: i32) -> (i32, i32) {
    %c0_i32 = arith.constant 0 : i32
    %c0_i32_0 = arith.constant 0 : i32
    return %arg0, %c0_i32 : i32, i32
  }
}

module attributes {stable_mosaic.version = 11 : i64} {
  func.func @_normalize_kernel(%arg0: i32, %arg1: i32, %arg2: memref<8x256xf32, #tpu.memory_space<vmem>>, %arg3: memref<8x1xf32, #tpu.memory_space<vmem>>, %arg4: memref<8x1xf32, #tpu.memory_space<vmem>>, %arg5: memref<8x256xf32, #tpu.memory_space<vmem>>) attributes {dimension_semantics = [#tpu.dimension_semantics<parallel>, #tpu.dimension_semantics<parallel>], iteration_bounds = array<i64: 1, 1>, scalar_prefetch = 0 : i64, scratch_operands = 0 : i64, tpu.core_type = #tpu.core_type<tc>, window_params = [{transform_indices = @transform_0, window_bounds = array<i64: 8, 256>}, {transform_indices = @transform_1, window_bounds = array<i64: 8, 1>}, {transform_indices = @transform_2, window_bounds = array<i64: 8, 1>}, {transform_indices = @transform_3, window_bounds = array<i64: 8, 256>}]} {
    %c0 = arith.constant 0 : index
    %c0_0 = arith.constant 0 : index
    %0 = vector.load %arg2[%c0, %c0_0] : memref<8x256xf32, #tpu.memory_space<vmem>>, vector<8x256xf32>
    %c0_1 = arith.constant 0 : index
    %c0_2 = arith.constant 0 : index
    %1 = vector.load %arg3[%c0_1, %c0_2] : memref<8x1xf32, #tpu.memory_space<vmem>>, vector<8x1xf32>
    %2 = vector.broadcast %1 : vector<8x1xf32> to vector<8x256xf32>
    %3 = arith.mulf %0, %2 : vector<8x256xf32>
    %c0_3 = arith.constant 0 : index
    %c0_4 = arith.constant 0 : index
    %4 = vector.load %arg4[%c0_3, %c0_4] : memref<8x1xf32, #tpu.memory_space<vmem>>, vector<8x1xf32>
    %5 = vector.broadcast %4 : vector<8x1xf32> to vector<8x256xf32>
    %6 = arith.addf %3, %5 : vector<8x256xf32>
    %c0_5 = arith.constant 0 : index
    %c0_6 = arith.constant 0 : index
    %7 = vector.load %arg5[%c0_5, %c0_6] : memref<8x256xf32, #tpu.memory_space<vmem>>, vector<8x256xf32>
    tpu.vector_store %arg5[%c0_5, %c0_6], %6 {strides = array<i32>} : memref<8x256xf32, #tpu.memory_space<vmem>>, vector<8x256xf32>,
    return
  }
  func.func @transform_0(%arg0: i32, %arg1: i32) -> (i32, i32) {
    %c0_i32 = arith.constant 0 : i32
    return %arg0, %arg1 : i32, i32
  }
  func.func @transform_1(%arg0: i32, %arg1: i32) -> (i32, i32) {
    %c0_i32 = arith.constant 0 : i32
    %c0_i32_0 = arith.constant 0 : i32
    return %arg0, %c0_i32 : i32, i32
  }
  func.func @transform_2(%arg0: i32, %arg1: i32) -> (i32, i32) {
    %c0_i32 = arith.constant 0 : i32
    %c0_i32_0 = arith.constant 0 : i32
    return %arg0, %c0_i32 : i32, i32
  }
  func.func @transform_3(%arg0: i32, %arg1: i32) -> (i32, i32) {
    %c0_i32 = arith.constant 0 : i32
    return %arg0, %arg1 : i32, i32
  }
}

</mosaic_0001>

<llo_original>
// kernel: new_batch_norm_2d.2
$region0: #{new_batch_norm_2d.2}
  #allocation0 [shape = 'u32[]', space=smem, size = 0x4, offset = 0x4, fixed_abs, tag = 'smem constant byte address 0x4 - core index']
  #allocation1 [shape = 'u32[144,128]{1,0:T(1,128)}', space=vmem, size = 0x12000, scoped, tag = 'internal scratch']
  %s0 = inlined_call_operand.vmem [shape: f32[8,256], index: 0, kind: input, shape index: {}]
  %s1 = inlined_call_operand.vmem [shape: f32[8,1], index: 1, kind: output, shape index: {0}]
  %s2 = inlined_call_operand.vmem [shape: f32[8,1], index: 2, kind: output, shape index: {1}]
  %3 = xla_tuple %s1, %s2
  %s4 = sld [smem:[#allocation0]]
  $region26: #{new_batch_norm_2d.2} parent=0
    _
  %s6 = ssub.s32 1, %s4
  %s7 = scalar_select 0, %s6, %s4
  // Predicated region
  $region2: #{new_batch_norm_2d.2} parent=0 // pred_check
    _
  $region3: #{new_batch_norm_2d.2} parent=0 // pred_check_branch
    %9 = sbr.rel (0) target = $region5
  $region4: #{new_batch_norm_2d.2} parent=0 // pred_region
    _
  $region5: #{new_batch_norm_2d.2} parent=0 // pred_fallthru
    _
  %p10 = scmp.eq.s32.totalorder 0, 0
  // Predicated region
  $region6: #{new_batch_norm_2d.2} parent=0 // pred_check
    %p11 = pneg %p10
  $region7: #{new_batch_norm_2d.2} parent=0 // pred_check_branch
    %13 = sbr.rel (%p11) target = $region9
  $region8: #{new_batch_norm_2d.2} parent=0 // pred_region
    %vm14 = vcmask 7168
    %15 = vst.msk [vmem:[%s1] sm:$0xff] %vm14, 0.0
    %16 = vst.msk [vmem:[%s2] sm:$0xff] %vm14, 0.0
  $region9: #{new_batch_norm_2d.2} parent=0 // pred_fallthru
    _
  %v17 = vld [vmem:[%s0] sm:$0xff]
  %v18 = vld [vmem:[%s0 + $0x8] sm:$0xff]
  %v19 = vld [vmem:[%s1] sm:$0xff]
  %v20 = vadd.f32 %v17, %v18
  %21 = vadd.xlane.f32.xlu0 %v20
  %v22 = vpop.xlane.xlu0 %21
  %v23 = vadd.f32 %v19, %v22
  %vm24 = vcmask 7168
  %25 = vst.msk [vmem:[%s1] sm:$0xff] %vm24, %v23
  %v26 = vld [vmem:[%s2] sm:$0xff]
  %v27 = vmul.f32 %v17, %v17
  %v28 = vmul.f32 %v18, %v18
  %v29 = vadd.f32 %v27, %v28
  %30 = vadd.xlane.f32.xlu0 %v29
  %v31 = vpop.xlane.xlu0 %30
  %v32 = vadd.f32 %v26, %v31
  %33 = vst.msk [vmem:[%s2] sm:$0xff] %vm24, %v32
  // Predicated region
  $region10: #{new_batch_norm_2d.2} parent=0 // pred_check
    _
  $region11: #{new_batch_norm_2d.2} parent=0 // pred_check_branch
    %35 = sbr.rel (0) target = $region13
  $region12: #{new_batch_norm_2d.2} parent=0 // pred_region
    _
  $region13: #{new_batch_norm_2d.2} parent=0 // pred_fallthru
    _
  // Predicated region
  $region14: #{new_batch_norm_2d.2} parent=0 // pred_check
    _
  $region15: #{new_batch_norm_2d.2} parent=0 // pred_check_branch
    %37 = sbr.rel (0) target = $region17
  $region16: #{new_batch_norm_2d.2} parent=0 // pred_region
    _
  $region17: #{new_batch_norm_2d.2} parent=0 // pred_fallthru
    _
  // Predicated region
  $region18: #{new_batch_norm_2d.2} parent=0 // pred_check
    _
  $region19: #{new_batch_norm_2d.2} parent=0 // pred_check_branch
    %39 = sbr.rel (0) target = $region21
  $region20: #{new_batch_norm_2d.2} parent=0 // pred_region
    _
  $region21: #{new_batch_norm_2d.2} parent=0 // pred_fallthru
    _
  // Predicated region
  $region22: #{new_batch_norm_2d.2} parent=0 // pred_check
    _
  $region23: #{new_batch_norm_2d.2} parent=0 // pred_check_branch
    %41 = sbr.rel (0) target = $region25
  $region24: #{new_batch_norm_2d.2} parent=0 // pred_region
    _
  $region25: #{new_batch_norm_2d.2} parent=0 // pred_fallthru
    _

// kernel: new_batch_norm_2d.3
$region0: #{new_batch_norm_2d.3}
  #allocation0 [shape = 'u32[]', space=smem, size = 0x4, offset = 0x4, fixed_abs, tag = 'smem constant byte address 0x4 - core index']
  #allocation1 [shape = 'u32[144,128]{1,0:T(1,128)}', space=vmem, size = 0x12000, scoped, tag = 'internal scratch']
  %s0 = inlined_call_operand.vmem [shape: f32[8,256], index: 0, kind: input, shape index: {}]
  %s1 = inlined_call_operand.vmem [shape: f32[8,1], index: 1, kind: input, shape index: {}]
  %s2 = inlined_call_operand.vmem [shape: f32[8,1], index: 2, kind: input, shape index: {}]
  %s3 = inlined_call_operand.vmem [shape: f32[8,256], index: 3, kind: output, shape index: {}]
  %s4 = sld [smem:[#allocation0]]
  $region22: #{new_batch_norm_2d.3} parent=0
    _
  %s6 = ssub.s32 1, %s4
  %s7 = scalar_select 0, %s6, %s4
  // Predicated region
  $region2: #{new_batch_norm_2d.3} parent=0 // pred_check
    _
  $region3: #{new_batch_norm_2d.3} parent=0 // pred_check_branch
    %9 = sbr.rel (0) target = $region5
  $region4: #{new_batch_norm_2d.3} parent=0 // pred_region
    _
  $region5: #{new_batch_norm_2d.3} parent=0 // pred_fallthru
    _
  // Predicated region
  $region6: #{new_batch_norm_2d.3} parent=0 // pred_check
    _
  $region7: #{new_batch_norm_2d.3} parent=0 // pred_check_branch
    %11 = sbr.rel (0) target = $region9
  $region8: #{new_batch_norm_2d.3} parent=0 // pred_region
    _
  $region9: #{new_batch_norm_2d.3} parent=0 // pred_fallthru
    _
  // Predicated region
  $region10: #{new_batch_norm_2d.3} parent=0 // pred_check
    _
  $region11: #{new_batch_norm_2d.3} parent=0 // pred_check_branch
    %13 = sbr.rel (0) target = $region13
  $region12: #{new_batch_norm_2d.3} parent=0 // pred_region
    _
  $region13: #{new_batch_norm_2d.3} parent=0 // pred_fallthru
    _
  %v14 = vld [vmem:[%s0] sm:$0xff]
  %v15 = vld [vmem:[%s0 + $0x8] sm:$0xff]
  %v16 = vld [vmem:[%s1] sm:$0xff]
  %18 = vset.pattern.permute.xlu0 0
  %19 = vperm.xlu0 %18, %v16
  %v20 = vpop.permute.xlu0 %19
  %v22 = vmul.f32 %v14, %v20
  %v23 = vmul.f32 %v15, %v20
  %v24 = vld [vmem:[%s2] sm:$0xff]
  %26 = vset.pattern.permute.xlu0 0
  %27 = vperm.xlu0 %26, %v24
  %v28 = vpop.permute.xlu0 %27
  %v30 = vadd.f32 %v22, %v28
  %v31 = vadd.f32 %v23, %v28
  %32 = vst [vmem:[%s3] sm:$0xff] %v30
  %33 = vst [vmem:[%s3 + $0x8] sm:$0xff] %v31
  // Predicated region
  $region14: #{new_batch_norm_2d.3} parent=0 // pred_check
    _
  $region15: #{new_batch_norm_2d.3} parent=0 // pred_check_branch
    %35 = sbr.rel (0) target = $region17
  $region16: #{new_batch_norm_2d.3} parent=0 // pred_region
    _
  $region17: #{new_batch_norm_2d.3} parent=0 // pred_fallthru
    _
  // Predicated region
  $region18: #{new_batch_norm_2d.3} parent=0 // pred_check
    _
  $region19: #{new_batch_norm_2d.3} parent=0 // pred_check_branch
    %37 = sbr.rel (0) target = $region21
  $region20: #{new_batch_norm_2d.3} parent=0 // pred_region
    _
  $region21: #{new_batch_norm_2d.3} parent=0 // pred_fallthru
    _

</llo_original>
